<compile_context>
chip_gen: v7x
topology: tpu7x:2x2x1
jax: 0.10.0
libtpu: 0.0.40
codegen_flags: <defaults>
</compile_context>

<pallas_src>
import functools

import jax
import jax.numpy as jnp
from jax.experimental import pallas as pl
from jax.experimental.pallas import tpu as pltpu


def mlp_kernel(x_ref, w1_ref, b1_ref, w2_ref, b2_ref, w3_ref, b3_ref, out_ref):
    """Fused 3-layer MLP: Linear+ReLU, Linear+ReLU, Linear (f32 accumulation)."""
    x = x_ref[...]

    h1 = jnp.dot(x, w1_ref[...], preferred_element_type=jnp.float32) + b1_ref[...]
    h1 = jnp.maximum(h1, 0.0)

    h2 = jnp.dot(h1, w2_ref[...], preferred_element_type=jnp.float32) + b2_ref[...]
    h2 = jnp.maximum(h2, 0.0)

    z = jnp.dot(h2, w3_ref[...], preferred_element_type=jnp.float32) + b3_ref[...]
    out_ref[...] = z.astype(out_ref.dtype)


def _round_up(n, m):
    return ((n + m - 1) // m) * m


@functools.partial(jax.jit, static_argnames=("batch_tile",))
def structural_equation_forward(s, params, batch_tile=256):
    """Run StructuralEquation.forward(s) with a Pallas kernel, tiled over batch."""
    (w1, b1), (w2, b2), (w3, b3) = params
    B, s_dim = s.shape
    h0 = w1.shape[1]
    h1d = w2.shape[1]
    z_dim = w3.shape[1]

    # Effective batch tile: multiple of 8 (sublanes), no larger than the padded batch.
    tile = min(_round_up(batch_tile, 8), _round_up(B, 8))
    B_pad = _round_up(B, tile)
    if B_pad != B:
        # Pad batch with zeros; extra rows are computed and sliced off (cheaper
        # and more robust than requiring B % batch_tile == 0).
        s = jnp.pad(s, ((0, B_pad - B), (0, 0)))
    grid = (B_pad // tile,)

    def x_map(i):  # batch-tiled input / output blocks
        return (i, 0)

    def rep_map(i):  # weights / biases: same block every step -> stay VMEM-resident
        return (0, 0)

    w_spec = lambda a: pl.BlockSpec(a.shape, rep_map)

    itemsize = s.dtype.itemsize
    weight_bytes = sum(a.size * a.dtype.itemsize for pair in params for a in pair)
    flops = 2 * B_pad * (s_dim * h0 + h0 * h1d + h1d * z_dim)
    bytes_accessed = B_pad * (s_dim + z_dim) * itemsize + weight_bytes
    cost = pl.CostEstimate(
        flops=flops, transcendentals=0, bytes_accessed=bytes_accessed
    )

    # VMEM budget: double-buffered x/out tiles, resident weights, f32 intermediates,
    # with headroom; capped at 64 MiB (v7x per-core VMEM).
    tile_io_bytes = 2 * tile * (s_dim + z_dim) * itemsize
    interm_bytes = tile * (h0 + h1d) * 4  # f32 intermediates
    vmem_limit = min(
        64 * 1024 * 1024,
        max(16 * 1024 * 1024, 4 * (tile_io_bytes + interm_bytes) + 4 * weight_bytes),
    )

    out = pl.pallas_call(
        mlp_kernel,
        out_shape=jax.ShapeDtypeStruct((B_pad, z_dim), s.dtype),
        grid_spec=pltpu.PrefetchScalarGridSpec(
            num_scalar_prefetch=0,
            grid=grid,
            in_specs=[
                pl.BlockSpec((tile, s_dim), x_map),
                w_spec(w1), w_spec(b1),
                w_spec(w2), w_spec(b2),
                w_spec(w3), w_spec(b3),
            ],
            out_specs=pl.BlockSpec((tile, z_dim), x_map),
        ),
        compiler_params=pltpu.CompilerParams(
            dimension_semantics=("parallel",),  # independent batch tiles -> megacore
            vmem_limit_bytes=int(vmem_limit),
        ),
        cost_estimate=cost,
    )(s, w1, b1, w2, b2, w3, b3)

    return out[:B]


def init_linear(key, in_dim, out_dim, dtype=jnp.float32):
    """Deterministic nn.Linear-style params, stored as (in, out) so kernel does x @ W + b."""
    kw, kb = jax.random.split(key)
    scale = 1.0 / jnp.sqrt(jnp.float32(in_dim))
    w = jax.random.uniform(kw, (in_dim, out_dim), dtype, -scale, scale)
    b = jax.random.uniform(kb, (1, out_dim), dtype, -scale, scale)  # 2D for TPU layout
    return w, b


def reference_forward(s, params):
    (w1, b1), (w2, b2), (w3, b3) = params
    h1 = jnp.maximum(s @ w1 + b1, 0.0)
    h2 = jnp.maximum(h1 @ w2 + b2, 0.0)
    return h2 @ w3 + b3


if __name__ == "__main__":
    # Small shapes consistent with StructuralEquation(s_dim, z_dim, hidden_dims=[256, 256]).
    batch = 40          # deliberately NOT a multiple of the tile -> exercises padding path
    s_dim = 24
    hidden_dims = [256, 256]
    z_dim = 16

    key = jax.random.PRNGKey(0)
    ks, k1, k2, k3 = jax.random.split(key, 4)

    s = jax.random.normal(ks, (batch, s_dim), jnp.float32)

    params = (
        init_linear(k1, s_dim, hidden_dims[0]),
        init_linear(k2, hidden_dims[0], hidden_dims[1]),
        init_linear(k3, hidden_dims[1], z_dim),
    )

    # Small batch_tile for the demo shape; defaults to 256 for realistic batches.
    z = structural_equation_forward(s, params, batch_tile=16)
    jax.block_until_ready(z)

    z_ref = reference_forward(s, params)
    assert z.shape == (batch, z_dim)
    assert jnp.allclose(z, z_ref, atol=1e-4, rtol=1e-4)

    print("KERNEL_OK")
</pallas_src>

<mosaic_0001>
module attributes {stable_mosaic.version = 11 : i64} {
  func.func @mlp_kernel(%arg0: i32, %arg1: memref<16x24xf32, #tpu.memory_space<vmem>>, %arg2: memref<24x256xf32, #tpu.memory_space<vmem>>, %arg3: memref<1x256xf32, #tpu.memory_space<vmem>>, %arg4: memref<256x256xf32, #tpu.memory_space<vmem>>, %arg5: memref<1x256xf32, #tpu.memory_space<vmem>>, %arg6: memref<256x16xf32, #tpu.memory_space<vmem>>, %arg7: memref<1x16xf32, #tpu.memory_space<vmem>>, %arg8: memref<16x16xf32, #tpu.memory_space<vmem>>) attributes {dimension_semantics = [#tpu.dimension_semantics<parallel>], iteration_bounds = array<i64: 3>, scalar_prefetch = 0 : i64, scratch_operands = 0 : i64, tpu.core_type = #tpu.core_type<tc>, window_params = [{transform_indices = @transform_0, window_bounds = array<i64: 16, 24>}, {pipeline_mode = #tpu.pipeline_mode<synchronous>, transform_indices = @transform_1, window_bounds = array<i64: 24, 256>}, {pipeline_mode = #tpu.pipeline_mode<synchronous>, transform_indices = @transform_2, window_bounds = array<i64: 1, 256>}, {pipeline_mode = #tpu.pipeline_mode<synchronous>, transform_indices = @transform_3, window_bounds = array<i64: 256, 256>}, {pipeline_mode = #tpu.pipeline_mode<synchronous>, transform_indices = @transform_4, window_bounds = array<i64: 1, 256>}, {pipeline_mode = #tpu.pipeline_mode<synchronous>, transform_indices = @transform_5, window_bounds = array<i64: 256, 16>}, {pipeline_mode = #tpu.pipeline_mode<synchronous>, transform_indices = @transform_6, window_bounds = array<i64: 1, 16>}, {transform_indices = @transform_7, window_bounds = array<i64: 16, 16>}]} {
    %c0 = arith.constant 0 : index
    %c0_0 = arith.constant 0 : index
    %0 = vector.load %arg1[%c0, %c0_0] : memref<16x24xf32, #tpu.memory_space<vmem>>, vector<16x24xf32>
    %c0_1 = arith.constant 0 : index
    %c0_2 = arith.constant 0 : index
    %1 = vector.load %arg2[%c0_1, %c0_2] : memref<24x256xf32, #tpu.memory_space<vmem>>, vector<24x256xf32>
    %cst = arith.constant dense<0.000000e+00> : vector<16x256xf32>
    %2 = tpu.matmul %0, %1, %cst {dimension_numbers = #tpu.dot_dimension_numbers<[1], [0], [0], [1], [0, 0, 1, 1], [], []>} : vector<16x24xf32>, vector<24x256xf32>, vector<16x256xf32> -> vector<16x256xf32>
    %c0_3 = arith.constant 0 : index
    %c0_4 = arith.constant 0 : index
    %3 = vector.load %arg3[%c0_3, %c0_4] : memref<1x256xf32, #tpu.memory_space<vmem>>, vector<1x256xf32>
    %4 = vector.broadcast %3 : vector<1x256xf32> to vector<16x256xf32>
    %5 = arith.addf %2, %4 : vector<16x256xf32>
    %cst_5 = arith.constant 0.000000e+00 : f32
    %6 = vector.broadcast %cst_5 : f32 to vector<16x256xf32>
    %7 = arith.maximumf %5, %6 : vector<16x256xf32>
    %c0_6 = arith.constant 0 : index
    %c0_7 = arith.constant 0 : index
    %8 = vector.load %arg4[%c0_6, %c0_7] : memref<256x256xf32, #tpu.memory_space<vmem>>, vector<256x256xf32>
    %cst_8 = arith.constant dense<0.000000e+00> : vector<16x256xf32>
    %9 = tpu.matmul %7, %8, %cst_8 {dimension_numbers = #tpu.dot_dimension_numbers<[1], [0], [0], [1], [0, 0, 1, 1], [], []>} : vector<16x256xf32>, vector<256x256xf32>, vector<16x256xf32> -> vector<16x256xf32>
    %c0_9 = arith.constant 0 : index
    %c0_10 = arith.constant 0 : index
    %10 = vector.load %arg5[%c0_9, %c0_10] : memref<1x256xf32, #tpu.memory_space<vmem>>, vector<1x256xf32>
    %11 = vector.broadcast %10 : vector<1x256xf32> to vector<16x256xf32>
    %12 = arith.addf %9, %11 : vector<16x256xf32>
    %cst_11 = arith.constant 0.000000e+00 : f32
    %13 = vector.broadcast %cst_11 : f32 to vector<16x256xf32>
    %14 = arith.maximumf %12, %13 : vector<16x256xf32>
    %c0_12 = arith.constant 0 : index
    %c0_13 = arith.constant 0 : index
    %15 = vector.load %arg6[%c0_12, %c0_13] : memref<256x16xf32, #tpu.memory_space<vmem>>, vector<256x16xf32>
    %cst_14 = arith.constant dense<0.000000e+00> : vector<16x16xf32>
    %16 = tpu.matmul %14, %15, %cst_14 {dimension_numbers = #tpu.dot_dimension_numbers<[1], [0], [0], [1], [0, 0, 1, 1], [], []>} : vector<16x256xf32>, vector<256x16xf32>, vector<16x16xf32> -> vector<16x16xf32>
    %c0_15 = arith.constant 0 : index
    %c0_16 = arith.constant 0 : index
    %17 = vector.load %arg7[%c0_15, %c0_16] : memref<1x16xf32, #tpu.memory_space<vmem>>, vector<1x16xf32>
    %18 = vector.broadcast %17 : vector<1x16xf32> to vector<16x16xf32>
    %19 = arith.addf %16, %18 : vector<16x16xf32>
    %c0_17 = arith.constant 0 : index
    %c0_18 = arith.constant 0 : index
    %20 = vector.load %arg8[%c0_17, %c0_18] : memref<16x16xf32, #tpu.memory_space<vmem>>, vector<16x16xf32>
    tpu.vector_store %arg8[%c0_17, %c0_18], %19 {strides = array<i32>} : memref<16x16xf32, #tpu.memory_space<vmem>>, vector<16x16xf32>,
    return
  }
  func.func @transform_0(%arg0: i32) -> (i32, i32) {
    %c0_i32 = arith.constant 0 : i32
    %c0_i32_0 = arith.constant 0 : i32
    return %arg0, %c0_i32 : i32, i32
  }
  func.func @transform_1(%arg0: i32) -> (i32, i32) {
    %c0_i32 = arith.constant 0 : i32
    %c0_i32_0 = arith.constant 0 : i32
    %c0_i32_1 = arith.constant 0 : i32
    return %c0_i32, %c0_i32_0 : i32, i32
  }
  func.func @transform_2(%arg0: i32) -> (i32, i32) {
    %c0_i32 = arith.constant 0 : i32
    %c0_i32_0 = arith.constant 0 : i32
    %c0_i32_1 = arith.constant 0 : i32
    return %c0_i32, %c0_i32_0 : i32, i32
  }
  func.func @transform_3(%arg0: i32) -> (i32, i32) {
    %c0_i32 = arith.constant 0 : i32
    %c0_i32_0 = arith.constant 0 : i32
    %c0_i32_1 = arith.constant 0 : i32
    return %c0_i32, %c0_i32_0 : i32, i32
  }
  func.func @transform_4(%arg0: i32) -> (i32, i32) {
    %c0_i32 = arith.constant 0 : i32
    %c0_i32_0 = arith.constant 0 : i32
    %c0_i32_1 = arith.constant 0 : i32
    return %c0_i32, %c0_i32_0 : i32, i32
  }
  func.func @transform_5(%arg0: i32) -> (i32, i32) {
    %c0_i32 = arith.constant 0 : i32
    %c0_i32_0 = arith.constant 0 : i32
    %c0_i32_1 = arith.constant 0 : i32
    return %c0_i32, %c0_i32_0 : i32, i32
  }
  func.func @transform_6(%arg0: i32) -> (i32, i32) {
    %c0_i32 = arith.constant 0 : i32
    %c0_i32_0 = arith.constant 0 : i32
    %c0_i32_1 = arith.constant 0 : i32
    return %c0_i32, %c0_i32_0 : i32, i32
  }
  func.func @transform_7(%arg0: i32) -> (i32, i32) {
    %c0_i32 = arith.constant 0 : i32
    %c0_i32_0 = arith.constant 0 : i32
    return %arg0, %c0_i32 : i32, i32
  }
}

</mosaic_0001>

<llo_original>
// kernel: structural_equation_forward.1
$region0: #{structural_equation_forward.1}
  #allocation0 [shape = 'u32[]', space=smem, size = 0x4, offset = 0x4, fixed_abs, tag = 'smem constant byte address 0x4 - core index']
  #allocation1 [shape = 'u32[144,128]{1,0:T(1,128)}', space=vmem, size = 0x12000, scoped, tag = 'internal scratch']
  %s0 = inlined_call_operand.vmem [shape: f32[48,24], index: 0, kind: input, shape index: {}]
  %s1 = inlined_call_operand.vmem [shape: f32[24,256], index: 1, kind: input, shape index: {}]
  %s2 = inlined_call_operand.vmem [shape: f32[1,256], index: 2, kind: input, shape index: {}]
  %s3 = inlined_call_operand.hbm [shape: f32[256,256], index: 3, kind: input, shape index: {}]
  %s4 = inlined_call_operand.vmem [shape: f32[1,256], index: 4, kind: input, shape index: {}]
  %s5 = inlined_call_operand.vmem [shape: f32[256,16], index: 5, kind: input, shape index: {}]
  %s6 = inlined_call_operand.vmem [shape: f32[1,16], index: 6, kind: input, shape index: {}]
  %s7 = inlined_call_operand.vmem [shape: f32[48,16], index: 7, kind: output, shape index: {}]
  %s8 = sld [smem:[#allocation0]]
  $region65: #{structural_equation_forward.1} parent=0
    _
  %s10 = ssub.s32 1, %s8
  %s11 = scalar_select 0, %s10, %s8
  $region1: #{structural_equation_forward.1} parent=0
    #allocation2 [shape = 'u8[262144]{0}', space=vmem, size = 0x40000, scoped, tag = 'input window, operand 3, single buffered']
    #allocation3 [shape = 's32[2]{0}', space=sflag, size = 0x8, scoped, tag = 'scoped memory for structural_equation_forward.1']
    %12 = vsyncpa [#allocation3], 0
    loop: start=0, step=1, limit=5
    $region2: #{structural_equation_forward.1} parent=1 // loop_pre_header
      _
    $region3: #{structural_equation_forward.1} parent=1 // loop_header
      %s14 = sphi 0, %s18
      %p15 = scmp.ge.s32.totalorder %s14, 5
      %s24 = sphi 0, %s26
      %s27 = sphi 0, %s24
      %s28 = sphi 0, %s27
      %s44 = sphi 0, %s28
      %s48 = sphi 0, %s48
      %s50 = sphi 0, %s48
      %s51 = sphi 0, %s50
      %s65 = sphi 0, %s51
      %s69 = sphi 0, %s69
      %s71 = sphi 0, %s69
      %s72 = sphi 0, %s71
      %s86 = sphi 0, %s72
      %s90 = sphi 0, %s90
      %s92 = sphi 0, %s90
      %s93 = sphi 0, %s92
      %s107 = sphi 0, %s93
      %s111 = sphi 0, %s111
      %s113 = sphi 0, %s111
      %s114 = sphi 0, %s113
      %s128 = sphi 0, %s114
      %s132 = sphi 0, %s132
      %s134 = sphi 0, %s132
      %s135 = sphi 0, %s134
      %s149 = sphi 0, %s135
      %s153 = sphi 0, %s153
      %s155 = sphi 0, %s153
      %s156 = sphi 0, %s155
      %s170 = sphi 0, %s156
      %s176 = sphi 0, %s178
      %s179 = sphi 0, %s176
      %s180 = sphi 0, %s179
      %s196 = sphi 0, %s180
    $region4: #{structural_equation_forward.1} parent=1 // loop_header_branch
      %17 = sbr.rel (%p15) target = $region8
    $region5: #{structural_equation_forward.1} parent=1 // loop_body
      %s19 = ssub.s32 %s14, 1
      %s20 = ssub.s32 %s14, 2
      %s21 = sadd.s32 %s14, 1
      %s22 = ssub.s32 %s14, %s21
      %p23 = scmp.eq.s32.totalorder %s22, 0
      %s25 = sadd.s32 %s24, 1
      %s26 = scalar_select %p23, %s24, %s25
      %p29 = pneg %p23
      %p30 = scmp.eq.s32.totalorder %s14, 2
      %p31 = por %p29, %p30
      %p32 = scmp.ne.s32.totalorder %s24, %s27
      %p33 = scmp.eq.s32.totalorder %s14, 0
      %p34 = por %p32, %p33
      %p35 = scmp.ne.s32.totalorder %s24, %s27
      %p36 = scmp.eq.s32.totalorder %s19, 2
      %p37 = por %p35, %p36
      %p38 = scmp.ne.s32.totalorder %s27, %s28
      %p39 = scmp.eq.s32.totalorder %s19, 0
      %p40 = por %p38, %p39
      %p41 = scmp.ne.s32.totalorder %s27, %s28
      %p42 = scmp.eq.s32.totalorder %s20, 2
      %p43 = por %p41, %p42
      %p45 = scmp.ne.s32.totalorder %s28, %s44
      %p46 = scmp.eq.s32.totalorder %s20, 0
      %p47 = por %p45, %p46
      %s49 = sadd.s32 %s48, 1
      %p52 = scmp.eq.s32.totalorder %s14, 2
      %p53 = scmp.ne.s32.totalorder %s48, %s50
      %p54 = scmp.eq.s32.totalorder %s14, 0
      %p55 = por %p53, %p54
      %p56 = scmp.ne.s32.totalorder %s48, %s50
      %p57 = scmp.eq.s32.totalorder %s19, 2
      %p58 = por %p56, %p57
      %p59 = scmp.ne.s32.totalorder %s50, %s51
      %p60 = scmp.eq.s32.totalorder %s19, 0
      %p61 = por %p59, %p60
      %p62 = scmp.ne.s32.totalorder %s50, %s51
      %p63 = scmp.eq.s32.totalorder %s20, 2
      %p64 = por %p62, %p63
      %p66 = scmp.ne.s32.totalorder %s51, %s65
      %p67 = scmp.eq.s32.totalorder %s20, 0
      %p68 = por %p66, %p67
      %s70 = sadd.s32 %s69, 1
      %p73 = scmp.eq.s32.totalorder %s14, 2
      %p74 = scmp.ne.s32.totalorder %s69, %s71
      %p75 = scmp.eq.s32.totalorder %s14, 0
      %p76 = por %p74, %p75
      %p77 = scmp.ne.s32.totalorder %s69, %s71
      %p78 = scmp.eq.s32.totalorder %s19, 2
      %p79 = por %p77, %p78
      %p80 = scmp.ne.s32.totalorder %s71, %s72
      %p81 = scmp.eq.s32.totalorder %s19, 0
      %p82 = por %p80, %p81
      %p83 = scmp.ne.s32.totalorder %s71, %s72
      %p84 = scmp.eq.s32.totalorder %s20, 2
      %p85 = por %p83, %p84
      %p87 = scmp.ne.s32.totalorder %s72, %s86
      %p88 = scmp.eq.s32.totalorder %s20, 0
      %p89 = por %p87, %p88
      %s91 = sadd.s32 %s90, 1
      %p94 = scmp.eq.s32.totalorder %s14, 2
      %p95 = scmp.ne.s32.totalorder %s90, %s92
      %p96 = scmp.eq.s32.totalorder %s14, 0
      %p97 = por %p95, %p96
      %p98 = scmp.ne.s32.totalorder %s90, %s92
      %p99 = scmp.eq.s32.totalorder %s19, 2
      %p100 = por %p98, %p99
      %p101 = scmp.ne.s32.totalorder %s92, %s93
      %p102 = scmp.eq.s32.totalorder %s19, 0
      %p103 = por %p101, %p102
      %p104 = scmp.ne.s32.totalorder %s92, %s93
      %p105 = scmp.eq.s32.totalorder %s20, 2
      %p106 = por %p104, %p105
      %p108 = scmp.ne.s32.totalorder %s93, %s107
      %p109 = scmp.eq.s32.totalorder %s20, 0
      %p110 = por %p108, %p109
      %s112 = sadd.s32 %s111, 1
      %p115 = scmp.eq.s32.totalorder %s14, 2
      %p116 = scmp.ne.s32.totalorder %s111, %s113
      %p117 = scmp.eq.s32.totalorder %s14, 0
      %p118 = por %p116, %p117
      %p119 = scmp.ne.s32.totalorder %s111, %s113
      %p120 = scmp.eq.s32.totalorder %s19, 2
      %p121 = por %p119, %p120
      %p122 = scmp.ne.s32.totalorder %s113, %s114
      %p123 = scmp.eq.s32.totalorder %s19, 0
      %p124 = por %p122, %p123
      %p125 = scmp.ne.s32.totalorder %s113, %s114
      %p126 = scmp.eq.s32.totalorder %s20, 2
      %p127 = por %p125, %p126
      %p129 = scmp.ne.s32.totalorder %s114, %s128
      %p130 = scmp.eq.s32.totalorder %s20, 0
      %p131 = por %p129, %p130
      %s133 = sadd.s32 %s132, 1
      %p136 = scmp.eq.s32.totalorder %s14, 2
      %p137 = scmp.ne.s32.totalorder %s132, %s134
      %p138 = scmp.eq.s32.totalorder %s14, 0
      %p139 = por %p137, %p138
      %p140 = scmp.ne.s32.totalorder %s132, %s134
      %p141 = scmp.eq.s32.totalorder %s19, 2
      %p142 = por %p140, %p141
      %p143 = scmp.ne.s32.totalorder %s134, %s135
      %p144 = scmp.eq.s32.totalorder %s19, 0
      %p145 = por %p143, %p144
      %p146 = scmp.ne.s32.totalorder %s134, %s135
      %p147 = scmp.eq.s32.totalorder %s20, 2
      %p148 = por %p146, %p147
      %p150 = scmp.ne.s32.totalorder %s135, %s149
      %p151 = scmp.eq.s32.totalorder %s20, 0
      %p152 = por %p150, %p151
      %s154 = sadd.s32 %s153, 1
      %p157 = scmp.eq.s32.totalorder %s14, 2
      %p158 = scmp.ne.s32.totalorder %s153, %s155
      %p159 = scmp.eq.s32.totalorder %s14, 0
      %p160 = por %p158, %p159
      %p161 = scmp.ne.s32.totalorder %s153, %s155
      %p162 = scmp.eq.s32.totalorder %s19, 2
      %p163 = por %p161, %p162
      %p164 = scmp.ne.s32.totalorder %s155, %s156
      %p165 = scmp.eq.s32.totalorder %s19, 0
      %p166 = por %p164, %p165
      %p167 = scmp.ne.s32.totalorder %s155, %s156
      %p168 = scmp.eq.s32.totalorder %s20, 2
      %p169 = por %p167, %p168
      %p171 = scmp.ne.s32.totalorder %s156, %s170
      %p172 = scmp.eq.s32.totalorder %s20, 0
      %p173 = por %p171, %p172
      %s174 = ssub.s32 %s14, %s21
      %p175 = scmp.eq.s32.totalorder %s174, 0
      %s177 = sadd.s32 %s176, 1
      %s178 = scalar_select %p175, %s176, %s177
      %p181 = pneg %p175
      %p182 = scmp.eq.s32.totalorder %s14, 2
      %p183 = por %p181, %p182
      %p184 = scmp.ne.s32.totalorder %s176, %s179
      %p185 = scmp.eq.s32.totalorder %s14, 0
      %p186 = por %p184, %p185
      %p187 = scmp.ne.s32.totalorder %s176, %s179
      %p188 = scmp.eq.s32.totalorder %s19, 2
      %p189 = por %p187, %p188
      %p190 = scmp.ne.s32.totalorder %s179, %s180
      %p191 = scmp.eq.s32.totalorder %s19, 0
      %p192 = por %p190, %p191
      %p193 = scmp.ne.s32.totalorder %s179, %s180
      %p194 = scmp.eq.s32.totalorder %s20, 2
      %p195 = por %p193, %p194
      %p197 = scmp.ne.s32.totalorder %s180, %s196
      %p198 = scmp.eq.s32.totalorder %s20, 0
      %p199 = por %p197, %p198
      %p200 = scmp.le.s32.totalorder 1, %s14
      %p201 = scmp.lt.s32.totalorder %s14, 4
      %p202 = pnand %p200, %p201
      %p203 = pneg %p202
      // Predicated region
      $region9: #{structural_equation_forward.1} parent=5 // pred_check
        _
      $region10: #{structural_equation_forward.1} parent=5 // pred_check_branch
        %205 = sbr.rel (%p202) target = $region12
      $region11: #{structural_equation_forward.1} parent=5 // pred_region
        %s206 = ssub.s32 %s14, 1
        // Predicated region
        $region13: #{structural_equation_forward.1} parent=11 // pred_check
          %p207 = pneg %p61
        $region14: #{structural_equation_forward.1} parent=11 // pred_check_branch
          %209 = sbr.rel (%p207) target = $region16
        $region15: #{structural_equation_forward.1} parent=11 // pred_region
          _
        $region16: #{structural_equation_forward.1} parent=11 // pred_fallthru
          _
        // Predicated region
        $region17: #{structural_equation_forward.1} parent=11 // pred_check
          %p210 = pneg %p82
        $region18: #{structural_equation_forward.1} parent=11 // pred_check_branch
          %212 = sbr.rel (%p210) target = $region20
        $region19: #{structural_equation_forward.1} parent=11 // pred_region
          _
        $region20: #{structural_equation_forward.1} parent=11 // pred_fallthru
          _
        // Predicated region
        $region21: #{structural_equation_forward.1} parent=11 // pred_check
          %p213 = pneg %p103
        $region22: #{structural_equation_forward.1} parent=11 // pred_check_branch
          %215 = sbr.rel (%p213) target = $region24
        $region23: #{structural_equation_forward.1} parent=11 // pred_region
          %s217 = ssub.s32 8192, 8192
          %218 = vsyncadd [#allocation3], %s217
          %s219 = sshll.u32 [#allocation2], 4
          %s220 = int_to_ptr.vmem [resolvable:$true] %s219
          %225 = dma.hbm_to_vmem [thread:$0]  %s3, 8192, %s220, [#allocation3], 256, 256, 16
        $region24: #{structural_equation_forward.1} parent=11 // pred_fallthru
          _
        // Predicated region
        $region25: #{structural_equation_forward.1} parent=11 // pred_check
          %p226 = pneg %p124
        $region26: #{structural_equation_forward.1} parent=11 // pred_check_branch
          %228 = sbr.rel (%p226) target = $region28
        $region27: #{structural_equation_forward.1} parent=11 // pred_region
          _
        $region28: #{structural_equation_forward.1} parent=11 // pred_fallthru
          _
        // Predicated region
        $region29: #{structural_equation_forward.1} parent=11 // pred_check
          %p229 = pneg %p145
        $region30: #{structural_equation_forward.1} parent=11 // pred_check_branch
          %231 = sbr.rel (%p229) target = $region32
        $region31: #{structural_equation_forward.1} parent=11 // pred_region
          _
        $region32: #{structural_equation_forward.1} parent=11 // pred_fallthru
          _
        // Predicated region
        $region33: #{structural_equation_forward.1} parent=11 // pred_check
          %p232 = pneg %p166
        $region34: #{structural_equation_forward.1} parent=11 // pred_check_branch
          %234 = sbr.rel (%p232) target = $region36
        $region35: #{structural_equation_forward.1} parent=11 // pred_region
          _
        $region36: #{structural_equation_forward.1} parent=11 // pred_fallthru
          _
      $region12: #{structural_equation_forward.1} parent=5 // pred_fallthru
        _
      %p235 = scmp.lt.s32.totalorder %s14, 3
      // Predicated region
      $region37: #{structural_equation_forward.1} parent=5 // pred_check
        %p236 = pneg %p235
      $region38: #{structural_equation_forward.1} parent=5 // pred_check_branch
        %238 = sbr.rel (%p236) target = $region40
      $region39: #{structural_equation_forward.1} parent=5 // pred_region
        // Predicated region
        $region41: #{structural_equation_forward.1} parent=39 // pred_check
          %p239 = pneg %p34
        $region42: #{structural_equation_forward.1} parent=39 // pred_check_branch
          %241 = sbr.rel (%p239) target = $region44
        $region43: #{structural_equation_forward.1} parent=39 // pred_region
          %s242 = smul.u32 2, %s14
          %p243 = scmp.lt.s32.totalorder %s242, 5
          %s244 = scalar_select %p243, %s242, 5
          %s245 = smul.addr %s244, 8
          %s246 = scalar_lea.vmem %s0, %s245
          %s247 = smul.u32 2, %s14
        $region44: #{structural_equation_forward.1} parent=39 // pred_fallthru
          _
      $region40: #{structural_equation_forward.1} parent=5 // pred_fallthru
        _
      %p248 = scmp.le.s32.totalorder 1, %s14
      %p249 = scmp.lt.s32.totalorder %s14, 4
      %p250 = pnand %p248, %p249
      %p251 = pneg %p250
      // Predicated region
      $region45: #{structural_equation_forward.1} parent=5 // pred_check
        _
      $region46: #{structural_equation_forward.1} parent=5 // pred_check_branch
        %253 = sbr.rel (%p250) target = $region48
      $region47: #{structural_equation_forward.1} parent=5 // pred_region
        %s254 = ssub.s32 %s14, 1
        // Predicated region
        $region49: #{structural_equation_forward.1} parent=47 // pred_check
          %p255 = pneg %p103
        $region50: #{structural_equation_forward.1} parent=47 // pred_check_branch
          %257 = sbr.rel (%p255) target = $region52
        $region51: #{structural_equation_forward.1} parent=47 // pred_region
          %258 = dma.done [#allocation3], 8192
        $region52: #{structural_equation_forward.1} parent=47 // pred_fallthru
          _
        %s259 = smul.u32 2, %s19
        %p260 = scmp.lt.s32.totalorder %s259, 5
        %s261 = scalar_select %p260, %s259, 5
        %s262 = smul.addr %s261, 8
        %s263 = scalar_lea.vmem %s0, %s262
        %p264 = pneg %p40
        %p265 = pneg %p37
        %p266 = pneg %p61
        %p267 = pneg %p58
        %p268 = pneg %p82
        %p269 = pneg %p79
        %p270 = pneg %p103
        %p271 = pneg %p100
        %p272 = pneg %p124
        %p273 = pneg %p121
        %p274 = pneg %p145
        %p275 = pneg %p142
        %p276 = pneg %p166
        %p277 = pneg %p163
        %p278 = pneg %p192
        %p279 = pneg %p189
        %s280 = smul.u32 2, %s19
        %p281 = scmp.lt.s32.totalorder %s280, 5
        %s282 = scalar_select %p281, %s280, 5
        %s283 = smul.addr %s282, 8
        %s284 = scalar_lea.vmem %s7, %s283
        %s285 = smul.u32 2, %s19
        %p286 = scmp.lt.s32.totalorder %s285, 5
        %s287 = scalar_select %p286, %s285, 5
        %s288 = smul.addr %s287, 8
        %s289 = scalar_lea.vmem %s0, %s288
        %s290 = smul.u32 2, %s19
        %s291 = smul.u32 2, %s19
        %p292 = scmp.lt.s32.totalorder %s291, 5
        %s293 = scalar_select %p292, %s291, 5
        %s294 = smul.addr %s293, 8
        %s295 = scalar_lea.vmem %s7, %s294
        %s296 = smul.u32 2, %s19
        %v297 = vld [vmem:[%s289] sm:$0xff]
        %v298 = vld [vmem:[%s289 + $0x8] sm:$0xff]
        %v299 = vld [vmem:[%s1] sm:$0xff]
        %v300 = vld [vmem:[%s1 + $0x8] sm:$0xff]
        %v301 = vld [vmem:[%s1 + $0x10] sm:$0xff]
        %v302 = vld [vmem:[%s1 + $0x18] sm:$0xff]
        %v303 = vld [vmem:[%s1 + $0x20] sm:$0xff]
        %v304 = vld [vmem:[%s1 + $0x28] sm:$0xff]
        %v305 = vld [vmem:[%s2] sm:$0x3]
        %v307 = vlaneseq
        %v308 = vshrl.u32 %v307, 7
        %v309 = vsub.s32 0, %v308
        %v310 = vrot.slane %v305, %v309
        %v311 = vlaneseq
        %v312 = vshrl.u32 %v311, 7
        %v313 = vsub.s32 1, %v312
        %v314 = vrot.slane %v305, %v313
        %vm317 = vcmask 195584
        %v319 = vsel %vm317, %v297, 0
        %v322 = vsel %vm317, %v298, 0
        %324 = vmatprep.subr.mxu0 %v300
        %325 = vmatpush1.msra.mxu0 %v299
        %326 = vmatprep.subr.mxu0 %v302
        %327 = vmatpush1.msra.mxu0 %v301
        %328 = vmatprep.subr.mxu0 %v304
        %329 = vmatpush1.msra.mxu0 %v303
        %330 = vmatprep.subr.mxu0 0.0
        %331 = vmatpush1.msra.mxu0 0.0
        %332 = vmatprep.subr.mxu0 0.0
        %333 = vmatpush1.msra.mxu0 0.0
        %334 = vmatprep.subr.mxu0 0.0
        %335 = vmatpush1.msra.mxu0 0.0
        %336 = vmatprep.subr.mxu0 0.0
        %337 = vmatpush1.msra.mxu0 0.0
        %338 = vmatprep.subr.mxu0 0.0
        %339 = vmatpush1.msra.mxu0 0.0
        %340 = vmatprep.subr.mxu0 0.0
        %341 = vmatpush1.msra.mxu0 0.0
        %342 = vmatprep.subr.mxu0 0.0
        %343 = vmatpush1.msra.mxu0 0.0
        %344 = vmatprep.subr.mxu0 0.0
        %345 = vmatpush1.msra.mxu0 0.0
        %346 = vmatprep.subr.mxu0 0.0
        %347 = vmatpush1.msra.mxu0 0.0
        %348 = vmatprep.subr.mxu0 0.0
        %349 = vmatpush1.msra.mxu0 0.0
        %350 = vmatprep.subr.mxu0 0.0
        %351 = vmatpush1.msra.mxu0 0.0
        %352 = vmatprep.subr.mxu0 0.0
        %353 = vmatpush1.msra.mxu0 0.0
        %354 = vmatprep.subr.mxu0 0.0
        %355 = vmatpush1.msra.mxu0 0.0
        %356 = vmatprep.subr.mxu0 0.0
        %357 = vmatpush1.msra.mxu0 0.0
        %358 = vmatprep.subr.mxu0 0.0
        %359 = vmatpush1.msra.mxu0 0.0
        %360 = vmatprep.subr.mxu0 0.0
        %361 = vmatpush1.msra.mxu0 0.0
        %362 = vmatprep.subr.mxu0 0.0
        %363 = vmatpush1.msra.mxu0 0.0
        %364 = vmatprep.subr.mxu0 0.0
        %365 = vmatpush1.msra.mxu0 0.0
        %366 = vmatprep.subr.mxu0 0.0
        %367 = vmatpush1.msra.mxu0 0.0
        %368 = vmatprep.subr.mxu0 0.0
        %369 = vmatpush1.msra.mxu0 0.0
        %370 = vmatprep.subr.mxu0 0.0
        %371 = vmatpush1.msra.mxu0 0.0
        %372 = vmatprep.subr.mxu0 0.0
        %373 = vmatpush1.msra.mxu0 0.0
        %374 = vmatprep.subr.mxu0 0.0
        %375 = vmatpush1.msra.mxu0 0.0
        %376 = vmatprep.subr.mxu0 0.0
        %377 = vmatpush1.msra.mxu0 0.0
        %378 = vmatprep.subr.mxu0 0.0
        %379 = vmatpush1.msra.mxu0 0.0
        %380 = vmatprep.subr.mxu0 0.0
        %381 = vmatpush1.msra.mxu0 0.0
        %382 = vmatprep.subr.mxu0 0.0
        %383 = vmatpush1.msra.mxu0 0.0
        %384 = vmatprep.subr.mxu0 0.0
        %385 = vmatpush1.msra.mxu0 0.0
        %386 = vmatprep.subr.mxu0 0.0
        %387 = vmatpush1.msra.mxu0 0.0
        %388 = vmatprep.mubr.f32.mxu0 0.0
        %389 = vmatmul.mubr.f32.gmra.mrb[0].mxu0 %v319
        %v390 = vpop.f32.mrb[0].mxu0
        %v391 = vadd.f32 %v310, %v390
        %v392 = vpop.f32.mrb[0].mxu0
        %v393 = vadd.f32 %v314, %v392
        %394 = vmatprep.mubr.f32.mxu0 0.0
        %395 = vmatmul.mubr.f32.gmra.mrb[0].mxu0 %v322
        %v396 = vpop.f32.mrb[0].mxu0
        %v397 = vadd.f32 %v310, %v396
        %v398 = vpop.f32.mrb[0].mxu0
        %v399 = vadd.f32 %v314, %v398
        %400 = vdwg.mxu0
        %v401 = vmax.f32 %v391, 0.0
        %v402 = vmax.f32 %v393, 0.0
        %v403 = vmax.f32 %v397, 0.0
        %v404 = vmax.f32 %v399, 0.0
        %v405 = vld [vmem:[#allocation2] sm:$0xff]
        %v406 = vld [vmem:[#allocation2 + $0x8] sm:$0xff]
        %v407 = vld [vmem:[#allocation2 + $0x10] sm:$0xff]
        %v408 = vld [vmem:[#allocation2 + $0x18] sm:$0xff]
        %v409 = vld [vmem:[#allocation2 + $0x20] sm:$0xff]
        %v410 = vld [vmem:[#allocation2 + $0x28] sm:$0xff]
        %v411 = vld [vmem:[#allocation2 + $0x30] sm:$0xff]
        %v412 = vld [vmem:[#allocation2 + $0x38] sm:$0xff]
        %v413 = vld [vmem:[#allocation2 + $0x40] sm:$0xff]
        %v414 = vld [vmem:[#allocation2 + $0x48] sm:$0xff]
        %v415 = vld [vmem:[#allocation2 + $0x50] sm:$0xff]
        %v416 = vld [vmem:[#allocation2 + $0x58] sm:$0xff]
        %v417 = vld [vmem:[#allocation2 + $0x60] sm:$0xff]
        %v418 = vld [vmem:[#allocation2 + $0x68] sm:$0xff]
        %v419 = vld [vmem:[#allocation2 + $0x70] sm:$0xff]
        %v420 = vld [vmem:[#allocation2 + $0x78] sm:$0xff]
        %v421 = vld [vmem:[#allocation2 + $0x80] sm:$0xff]
        %v422 = vld [vmem:[#allocation2 + $0x88] sm:$0xff]
        %v423 = vld [vmem:[#allocation2 + $0x90] sm:$0xff]
        %v424 = vld [vmem:[#allocation2 + $0x98] sm:$0xff]
        %v425 = vld [vmem:[#allocation2 + $0xa0] sm:$0xff]
        %v426 = vld [vmem:[#allocation2 + $0xa8] sm:$0xff]
        %v427 = vld [vmem:[#allocation2 + $0xb0] sm:$0xff]
        %v428 = vld [vmem:[#allocation2 + $0xb8] sm:$0xff]
        %v429 = vld [vmem:[#allocation2 + $0xc0] sm:$0xff]
        %v430 = vld [vmem:[#allocation2 + $0xc8] sm:$0xff]
        %v431 = vld [vmem:[#allocation2 + $0xd0] sm:$0xff]
        %v432 = vld [vmem:[#allocation2 + $0xd8] sm:$0xff]
        %v433 = vld [vmem:[#allocation2 + $0xe0] sm:$0xff]
        %v434 = vld [vmem:[#allocation2 + $0xe8] sm:$0xff]
        %v435 = vld [vmem:[#allocation2 + $0xf0] sm:$0xff]
        %v436 = vld [vmem:[#allocation2 + $0xf8] sm:$0xff]
        %v437 = vld [vmem:[#allocation2 + $0x100] sm:$0xff]
        %v438 = vld [vmem:[#allocation2 + $0x108] sm:$0xff]
        %v439 = vld [vmem:[#allocation2 + $0x110] sm:$0xff]
        %v440 = vld [vmem:[#allocation2 + $0x118] sm:$0xff]
        %v441 = vld [vmem:[#allocation2 + $0x120] sm:$0xff]
        %v442 = vld [vmem:[#allocation2 + $0x128] sm:$0xff]
        %v443 = vld [vmem:[#allocation2 + $0x130] sm:$0xff]
        %v444 = vld [vmem:[#allocation2 + $0x138] sm:$0xff]
        %v445 = vld [vmem:[#allocation2 + $0x140] sm:$0xff]
        %v446 = vld [vmem:[#allocation2 + $0x148] sm:$0xff]
        %v447 = vld [vmem:[#allocation2 + $0x150] sm:$0xff]
        %v448 = vld [vmem:[#allocation2 + $0x158] sm:$0xff]
        %v449 = vld [vmem:[#allocation2 + $0x160] sm:$0xff]
        %v450 = vld [vmem:[#allocation2 + $0x168] sm:$0xff]
        %v451 = vld [vmem:[#allocation2 + $0x170] sm:$0xff]
        %v452 = vld [vmem:[#allocation2 + $0x178] sm:$0xff]
        %v453 = vld [vmem:[#allocation2 + $0x180] sm:$0xff]
        %v454 = vld [vmem:[#allocation2 + $0x188] sm:$0xff]
        %v455 = vld [vmem:[#allocation2 + $0x190] sm:$0xff]
        %v456 = vld [vmem:[#allocation2 + $0x198] sm:$0xff]
        %v457 = vld [vmem:[#allocation2 + $0x1a0] sm:$0xff]
        %v458 = vld [vmem:[#allocation2 + $0x1a8] sm:$0xff]
        %v459 = vld [vmem:[#allocation2 + $0x1b0] sm:$0xff]
        %v460 = vld [vmem:[#allocation2 + $0x1b8] sm:$0xff]
        %v461 = vld [vmem:[#allocation2 + $0x1c0] sm:$0xff]
        %v462 = vld [vmem:[#allocation2 + $0x1c8] sm:$0xff]
        %v463 = vld [vmem:[#allocation2 + $0x1d0] sm:$0xff]
        %v464 = vld [vmem:[#allocation2 + $0x1d8] sm:$0xff]
        %v465 = vld [vmem:[#allocation2 + $0x1e0] sm:$0xff]
        %v466 = vld [vmem:[#allocation2 + $0x1e8] sm:$0xff]
        %v467 = vld [vmem:[#allocation2 + $0x1f0] sm:$0xff]
        %v468 = vld [vmem:[#allocation2 + $0x1f8] sm:$0xff]
        %v469 = vld [vmem:[%s4] sm:$0x3]
        %v471 = vlaneseq
        %v472 = vshrl.u32 %v471, 7
        %v473 = vsub.s32 0, %v472
        %v474 = vrot.slane %v469, %v473
        %v475 = vlaneseq
        %v476 = vshrl.u32 %v475, 7
        %v477 = vsub.s32 1, %v476
        %v478 = vrot.slane %v469, %v477
        %481 = vmatprep.subr.mxu0 %v406
        %482 = vmatpush1.msra.mxu0 %v405
        %483 = vmatprep.subr.mxu0 %v408
        %484 = vmatpush1.msra.mxu0 %v407
        %485 = vmatprep.subr.mxu0 %v410
        %486 = vmatpush1.msra.mxu0 %v409
        %487 = vmatprep.subr.mxu0 %v412
        %488 = vmatpush1.msra.mxu0 %v411
        %489 = vmatprep.subr.mxu0 %v414
        %490 = vmatpush1.msra.mxu0 %v413
        %491 = vmatprep.subr.mxu0 %v416
        %492 = vmatpush1.msra.mxu0 %v415
        %493 = vmatprep.subr.mxu0 %v418
        %494 = vmatpush1.msra.mxu0 %v417
        %495 = vmatprep.subr.mxu0 %v420
        %496 = vmatpush1.msra.mxu0 %v419
        %497 = vmatprep.subr.mxu0 %v422
        %498 = vmatpush1.msra.mxu0 %v421
        %499 = vmatprep.subr.mxu0 %v424
        %500 = vmatpush1.msra.mxu0 %v423
        %501 = vmatprep.subr.mxu0 %v426
        %502 = vmatpush1.msra.mxu0 %v425
        %503 = vmatprep.subr.mxu0 %v428
        %504 = vmatpush1.msra.mxu0 %v427
        %505 = vmatprep.subr.mxu0 %v430
        %506 = vmatpush1.msra.mxu0 %v429
        %507 = vmatprep.subr.mxu0 %v432
        %508 = vmatpush1.msra.mxu0 %v431
        %509 = vmatprep.subr.mxu0 %v434
        %510 = vmatpush1.msra.mxu0 %v433
        %511 = vmatprep.subr.mxu0 %v436
        %512 = vmatpush1.msra.mxu0 %v435
        %513 = vmatprep.subr.mxu0 %v438
        %514 = vmatpush1.msra.mxu0 %v437
        %515 = vmatprep.subr.mxu0 %v440
        %516 = vmatpush1.msra.mxu0 %v439
        %517 = vmatprep.subr.mxu0 %v442
        %518 = vmatpush1.msra.mxu0 %v441
        %519 = vmatprep.subr.mxu0 %v444
        %520 = vmatpush1.msra.mxu0 %v443
        %521 = vmatprep.subr.mxu0 %v446
        %522 = vmatpush1.msra.mxu0 %v445
        %523 = vmatprep.subr.mxu0 %v448
        %524 = vmatpush1.msra.mxu0 %v447
        %525 = vmatprep.subr.mxu0 %v450
        %526 = vmatpush1.msra.mxu0 %v449
        %527 = vmatprep.subr.mxu0 %v452
        %528 = vmatpush1.msra.mxu0 %v451
        %529 = vmatprep.subr.mxu0 %v454
        %530 = vmatpush1.msra.mxu0 %v453
        %531 = vmatprep.subr.mxu0 %v456
        %532 = vmatpush1.msra.mxu0 %v455
        %533 = vmatprep.subr.mxu0 %v458
        %534 = vmatpush1.msra.mxu0 %v457
        %535 = vmatprep.subr.mxu0 %v460
        %536 = vmatpush1.msra.mxu0 %v459
        %537 = vmatprep.subr.mxu0 %v462
        %538 = vmatpush1.msra.mxu0 %v461
        %539 = vmatprep.subr.mxu0 %v464
        %540 = vmatpush1.msra.mxu0 %v463
        %541 = vmatprep.subr.mxu0 %v466
        %542 = vmatpush1.msra.mxu0 %v465
        %543 = vmatprep.subr.mxu0 %v468
        %544 = vmatpush1.msra.mxu0 %v467
        %545 = vmatprep.mubr.f32.mxu0 %v402
        %546 = vmatmul.mubr.f32.gmra.mrb[0].mxu0 %v401
        %v547 = vpop.f32.mrb[0].mxu0
        %v548 = vadd.f32 %v474, %v547
        %v549 = vpop.f32.mrb[0].mxu0
        %v550 = vadd.f32 %v478, %v549
        %551 = vmatprep.mubr.f32.mxu0 %v404
        %552 = vmatmul.mubr.f32.gmra.mrb[0].mxu0 %v403
        %v553 = vpop.f32.mrb[0].mxu0
        %v554 = vadd.f32 %v474, %v553
        %v555 = vpop.f32.mrb[0].mxu0
        %v556 = vadd.f32 %v478, %v555
        %557 = vdwg.mxu0
        %v558 = vmax.f32 %v548, 0.0
        %v559 = vmax.f32 %v550, 0.0
        %v560 = vmax.f32 %v554, 0.0
        %v561 = vmax.f32 %v556, 0.0
        %v562 = vld [vmem:[%s5] sm:$0xff]
        %v563 = vld [vmem:[%s5 + $0x8] sm:$0xff]
        %v564 = vld [vmem:[%s5 + $0x10] sm:$0xff]
        %v565 = vld [vmem:[%s5 + $0x18] sm:$0xff]
        %v566 = vld [vmem:[%s5 + $0x20] sm:$0xff]
        %v567 = vld [vmem:[%s5 + $0x28] sm:$0xff]
        %v568 = vld [vmem:[%s5 + $0x30] sm:$0xff]
        %v569 = vld [vmem:[%s5 + $0x38] sm:$0xff]
        %v570 = vld [vmem:[%s5 + $0x40] sm:$0xff]
        %v571 = vld [vmem:[%s5 + $0x48] sm:$0xff]
        %v572 = vld [vmem:[%s5 + $0x50] sm:$0xff]
        %v573 = vld [vmem:[%s5 + $0x58] sm:$0xff]
        %v574 = vld [vmem:[%s5 + $0x60] sm:$0xff]
        %v575 = vld [vmem:[%s5 + $0x68] sm:$0xff]
        %v576 = vld [vmem:[%s5 + $0x70] sm:$0xff]
        %v577 = vld [vmem:[%s5 + $0x78] sm:$0xff]
        %v578 = vld [vmem:[%s5 + $0x80] sm:$0xff]
        %v579 = vld [vmem:[%s5 + $0x88] sm:$0xff]
        %v580 = vld [vmem:[%s5 + $0x90] sm:$0xff]
        %v581 = vld [vmem:[%s5 + $0x98] sm:$0xff]
        %v582 = vld [vmem:[%s5 + $0xa0] sm:$0xff]
        %v583 = vld [vmem:[%s5 + $0xa8] sm:$0xff]
        %v584 = vld [vmem:[%s5 + $0xb0] sm:$0xff]
        %v585 = vld [vmem:[%s5 + $0xb8] sm:$0xff]
        %v586 = vld [vmem:[%s5 + $0xc0] sm:$0xff]
        %v587 = vld [vmem:[%s5 + $0xc8] sm:$0xff]
        %v588 = vld [vmem:[%s5 + $0xd0] sm:$0xff]
        %v589 = vld [vmem:[%s5 + $0xd8] sm:$0xff]
        %v590 = vld [vmem:[%s5 + $0xe0] sm:$0xff]
        %v591 = vld [vmem:[%s5 + $0xe8] sm:$0xff]
        %v592 = vld [vmem:[%s5 + $0xf0] sm:$0xff]
        %v593 = vld [vmem:[%s5 + $0xf8] sm:$0xff]
        %v594 = vld [vmem:[%s6] sm:$0x1]
        %v596 = vlaneseq
        %v597 = vshrl.u32 %v596, 7
        %v598 = vsub.s32 0, %v597
        %v599 = vrot.slane %v594, %v598
        %601 = vmatprep.subr.mxu0 0.0
        %602 = vmatpush1.msra.mxu0 %v562
        %603 = vmatprep.subr.mxu0 0.0
        %604 = vmatpush1.msra.mxu0 %v563
        %605 = vmatprep.subr.mxu0 0.0
        %606 = vmatpush1.msra.mxu0 %v564
        %607 = vmatprep.subr.mxu0 0.0
        %608 = vmatpush1.msra.mxu0 %v565
        %609 = vmatprep.subr.mxu0 0.0
        %610 = vmatpush1.msra.mxu0 %v566
        %611 = vmatprep.subr.mxu0 0.0
        %612 = vmatpush1.msra.mxu0 %v567
        %613 = vmatprep.subr.mxu0 0.0
        %614 = vmatpush1.msra.mxu0 %v568
        %615 = vmatprep.subr.mxu0 0.0
        %616 = vmatpush1.msra.mxu0 %v569
        %617 = vmatprep.subr.mxu0 0.0
        %618 = vmatpush1.msra.mxu0 %v570
        %619 = vmatprep.subr.mxu0 0.0
        %620 = vmatpush1.msra.mxu0 %v571
        %621 = vmatprep.subr.mxu0 0.0
        %622 = vmatpush1.msra.mxu0 %v572
        %623 = vmatprep.subr.mxu0 0.0
        %624 = vmatpush1.msra.mxu0 %v573
        %625 = vmatprep.subr.mxu0 0.0
        %626 = vmatpush1.msra.mxu0 %v574
        %627 = vmatprep.subr.mxu0 0.0
        %628 = vmatpush1.msra.mxu0 %v575
        %629 = vmatprep.subr.mxu0 0.0
        %630 = vmatpush1.msra.mxu0 %v576
        %631 = vmatprep.subr.mxu0 0.0
        %632 = vmatpush1.msra.mxu0 %v577
        %633 = vmatprep.subr.mxu0 0.0
        %634 = vmatpush1.msra.mxu0 %v578
        %635 = vmatprep.subr.mxu0 0.0
        %636 = vmatpush1.msra.mxu0 %v579
        %637 = vmatprep.subr.mxu0 0.0
        %638 = vmatpush1.msra.mxu0 %v580
        %639 = vmatprep.subr.mxu0 0.0
        %640 = vmatpush1.msra.mxu0 %v581
        %641 = vmatprep.subr.mxu0 0.0
        %642 = vmatpush1.msra.mxu0 %v582
        %643 = vmatprep.subr.mxu0 0.0
        %644 = vmatpush1.msra.mxu0 %v583
        %645 = vmatprep.subr.mxu0 0.0
        %646 = vmatpush1.msra.mxu0 %v584
        %647 = vmatprep.subr.mxu0 0.0
        %648 = vmatpush1.msra.mxu0 %v585
        %649 = vmatprep.subr.mxu0 0.0
        %650 = vmatpush1.msra.mxu0 %v586
        %651 = vmatprep.subr.mxu0 0.0
        %652 = vmatpush1.msra.mxu0 %v587
        %653 = vmatprep.subr.mxu0 0.0
        %654 = vmatpush1.msra.mxu0 %v588
        %655 = vmatprep.subr.mxu0 0.0
        %656 = vmatpush1.msra.mxu0 %v589
        %657 = vmatprep.subr.mxu0 0.0
        %658 = vmatpush1.msra.mxu0 %v590
        %659 = vmatprep.subr.mxu0 0.0
        %660 = vmatpush1.msra.mxu0 %v591
        %661 = vmatprep.subr.mxu0 0.0
        %662 = vmatpush1.msra.mxu0 %v592
        %663 = vmatprep.subr.mxu0 0.0
        %664 = vmatpush1.msra.mxu0 %v593
        %665 = vmatprep.mubr.f32.mxu0 %v559
        %666 = vmatmul.mubr.f32.gmra.mrb[0].mxu0 %v558
        %v667 = vpop.f32.mrb[0].mxu0
        %v668 = vadd.f32 %v599, %v667
        %v669 = vpop.f32.mrb[0].mxu0
        %670 = vmatprep.mubr.f32.mxu0 %v561
        %671 = vmatmul.mubr.f32.gmra.mrb[0].mxu0 %v560
        %v672 = vpop.f32.mrb[0].mxu0
        %v673 = vadd.f32 %v599, %v672
        %v674 = vpop.f32.mrb[0].mxu0
        %675 = vdwg.mxu0
        %vm676 = vcmask 130048
        %677 = vst.msk [vmem:[%s295] sm:$0xff] %vm676, %v668
        %678 = vst.msk [vmem:[%s295 + $0x8] sm:$0xff] %vm676, %v673
        %s679 = smul.u32 2, %s19
        %p680 = scmp.lt.s32.totalorder %s679, 5
        %s681 = scalar_select %p680, %s679, 5
        %s682 = smul.addr %s681, 8
        %s683 = scalar_lea.vmem %s7, %s682
        // Predicated region
        $region53: #{structural_equation_forward.1} parent=47 // pred_check
          %p684 = pneg %p189
        $region54: #{structural_equation_forward.1} parent=47 // pred_check_branch
          %686 = sbr.rel (%p684) target = $region56
        $region55: #{structural_equation_forward.1} parent=47 // pred_region
          %s687 = smul.u32 2, %s19
        $region56: #{structural_equation_forward.1} parent=47 // pred_fallthru
          _
      $region48: #{structural_equation_forward.1} parent=5 // pred_fallthru
        _
      %p688 = scmp.le.s32.totalorder 2, %s14
      // Predicated region
      $region57: #{structural_equation_forward.1} parent=5 // pred_check
        %p689 = pneg %p688
      $region58: #{structural_equation_forward.1} parent=5 // pred_check_branch
        %691 = sbr.rel (%p689) target = $region60
      $region59: #{structural_equation_forward.1} parent=5 // pred_region
        %s692 = ssub.s32 %s14, 2
        // Predicated region
        $region61: #{structural_equation_forward.1} parent=59 // pred_check
          %p693 = pneg %p195
        $region62: #{structural_equation_forward.1} parent=59 // pred_check_branch
          %695 = sbr.rel (%p693) target = $region64
        $region63: #{structural_equation_forward.1} parent=59 // pred_region
          %s696 = smul.u32 2, %s20
          %p697 = scmp.lt.s32.totalorder %s696, 5
          %s698 = scalar_select %p697, %s696, 5
          %s699 = smul.addr %s698, 8
          %s700 = scalar_lea.vmem %s7, %s699
        $region64: #{structural_equation_forward.1} parent=59 // pred_fallthru
          _
      $region60: #{structural_equation_forward.1} parent=5 // pred_fallthru
        _
    $region6: #{structural_equation_forward.1} parent=1 // loop_footer
      %s18 = sadd.s32 1, %s14
    $region7: #{structural_equation_forward.1} parent=1 // loop_footer_branch
      %13 = sbr.rel target = $region3
    $region8: #{structural_equation_forward.1} parent=1 // loop_exit
      _
    %701 = vsyncpa [#allocation3], 1
    %s702 = scalar_lea.sflag [#allocation3], 1
    %703 = vsyncpa %s702, 1

</llo_original>
